<compile_context>
chip_gen: v7x
topology: tpu7x:2x2x1
jax: 0.10.0
libtpu: 0.0.40
codegen_flags: <defaults>
</compile_context>

<pallas_src>
import math

import jax
import jax.numpy as jnp
from jax.experimental import pallas as pl
from jax.experimental.pallas import tpu as pltpu


def get_last_window_time_point(kernel_size: int) -> float:
    # Periodic general-cosine window: t_n = 2*pi*n / kernel_size.
    return 2.0 * math.pi * (kernel_size - 1) / kernel_size


def _round_up(x: int, m: int) -> int:
    return ((x + m - 1) // m) * m


def _general_cosine_window_kernel(params_ref, table_ref, out_ref):
    """out[b, k] = sum_p params[b, p] * table[p, k].

    params_ref: (tb, P)   window coefficients for this row-tile
    table_ref:  (P, tk)   precomputed f32  cos(p*pi) * cos(A_init[p, :])
    out_ref:    (tb, tk)
    P is tiny (2 for Hann, 3 for Blackman, ...): unrolled VPU broadcast-FMA.
    Deliberately NOT jnp.dot -- the MXU would be >95% zero-padding on P.
    """
    pm = params_ref[...].astype(jnp.float32)       # (tb, P)
    table = table_ref[...]                         # (P, tk), already f32
    P = table.shape[0]
    # Init with the p=0 term (saves a full-tile zero-fill + add).
    acc = pm[:, 0:1] * table[0:1, :]
    for p in range(1, P):
        acc = acc + pm[:, p:p + 1] * table[p:p + 1, :]
    out_ref[...] = acc.astype(out_ref.dtype)


class GeneralCosineWindow:
    """JAX/Pallas port of IConNet's GeneralCosineWindow parametrization."""

    _TB_MAX = 1024              # row-tile cap (multiple of 8)
    _TK_MAX = 2048              # lane-tile cap (multiple of 128)
    _XLA_FAST_PATH_BYTES = 1 << 20   # below this, a plain XLA dot is faster

    def __init__(self, kernel_size, window_params=(0.5, 0.5),
                 dtype=jnp.float32, force_pallas=False):
        assert window_params is not None
        self.kernel_size = int(kernel_size)
        self.dtype = dtype
        self.force_pallas = bool(force_pallas)
        self.window_params = jnp.asarray(window_params, dtype=dtype)
        assert self.window_params.ndim in (1, 3)
        self.windows_k = self.window_params.shape[-1]
        self.shared_window = self.window_params.ndim == 1

        # Constant buffers: kept in float32 regardless of self.dtype so the
        # precomputed table does not lose precision (cast only on final store).
        self.i = jnp.arange(self.windows_k, dtype=jnp.float32)              # (P,)
        last_t = get_last_window_time_point(self.kernel_size)
        t = jnp.linspace(0.0, last_t, self.kernel_size, dtype=jnp.float32)  # (K,)
        self.A_init = jnp.einsum('p,k->pk', self.i, t)                      # (P, K)

        # Precompute the whole cosine table ONCE: cos(p*pi) * cos(A_init[p,k]).
        # No transcendentals in the hot path.  Exact K -- no lane padding;
        # the kernel uses exact-K (or 128-aligned) output blocks instead.
        sign = jnp.cos(self.i * jnp.pi)                                     # (P,)
        self.cos_table = sign[:, None] * jnp.cos(self.A_init)               # (P, K) f32

    def _generate_windows(self):
        params = self.window_params
        lead_shape = params.shape[:-1]
        P = self.windows_k
        K = self.kernel_size

        params2d = params.reshape(-1, P)          # (B, P) glue reshape
        B = params2d.shape[0]

        # Tiny problems (shared Hann, small per-channel banks): a fused XLA dot
        # is strictly faster than any Pallas launch on all generations.
        if (not self.force_pallas) and B * K * 4 < self._XLA_FAST_PATH_BYTES:
            out = jnp.dot(params2d.astype(jnp.float32), self.cos_table)
            return out.astype(self.dtype).reshape(lead_shape + (K,))

        # Lane (K) tile: exact K if it fits (block dim == full dim is legal for
        # any K, masked stores only on the last 128-lane group); otherwise a
        # 128-aligned tile and a second grid axis over K.
        tk = K if K <= self._TK_MAX else self._TK_MAX

        # Row (B) tile: never pad B beyond the next multiple of 8, and avoid
        # the post-call slice entirely whenever possible.
        if B % 8 == 0:
            b_pad, tb, need_slice = B, min(self._TB_MAX, B), False
        elif B <= self._TB_MAX:
            # Row-block equal to the full array dim is always legal -> no pad.
            b_pad, tb, need_slice = B, B, False
        else:
            b_pad, tb, need_slice = _round_up(B, 8), self._TB_MAX, True

        params2d_p = (params2d if b_pad == B
                      else jnp.pad(params2d, ((0, b_pad - B), (0, 0))))

        grid = (pl.cdiv(b_pad, tb), pl.cdiv(K, tk))

        # Explicit scoped-VMEM budget (v5e's 16 MiB default is too small for
        # the larger tiles; <= 48 MiB stays safe on v7x's 64 MiB physical VMEM).
        need = (2 * tb * tk * 4                                   # out, dbl-buffered
                + 2 * _round_up(tb, 8) * 128 * 4                  # params (lane-padded)
                + 2 * _round_up(P, 8) * _round_up(tk, 128) * 4)   # cos table
        vmem_limit = int(min(max(need + (8 << 20), 32 << 20), 48 << 20))

        out2d = pl.pallas_call(
            _general_cosine_window_kernel,
            out_shape=jax.ShapeDtypeStruct((b_pad, K), self.dtype),
            grid=grid,
            in_specs=[
                pl.BlockSpec((tb, P), lambda i, j: (i, 0)),
                pl.BlockSpec((P, tk), lambda i, j: (0, j)),
            ],
            out_specs=pl.BlockSpec((tb, tk), lambda i, j: (i, j)),
            compiler_params=pltpu.CompilerParams(
                dimension_semantics=("parallel", "parallel"),
                vmem_limit_bytes=vmem_limit),
        )(params2d_p, self.cos_table)

        if need_slice:                              # rare: huge, unaligned B
            out2d = out2d[:B]
        return out2d.reshape(lead_shape + (K,))

    def forward(self, A=None):
        # Original module ignores its input `A` and regenerates the windows.
        return self._generate_windows()

    def right_verse(self, A=None):
        return self._generate_windows()

    __call__ = forward


def _reference(mod, params):
    """Pure-JAX reference of the PyTorch einsum + reduce('... p k -> ... k')."""
    return jnp.einsum('...p,p,pk->...k',
                      jnp.asarray(params, jnp.float32),
                      jnp.cos(mod.i * jnp.pi),
                      jnp.cos(mod.A_init))


if __name__ == "__main__":
    key = jax.random.PRNGKey(0)

    # 1) 3-D (per-channel) window params: (H=2, C=4, P=3), K=128 (lane-aligned).
    H, C, P, K = 2, 4, 3, 128
    params3d = jax.random.uniform(key, (H, C, P), dtype=jnp.float32)
    mod = GeneralCosineWindow(kernel_size=K, window_params=params3d,
                              force_pallas=True)
    win = jax.block_until_ready(mod.forward(None))
    assert win.shape == (H, C, K), win.shape
    assert jnp.allclose(win, _reference(mod, params3d), atol=1e-5, rtol=1e-5)

    # 2) Non-multiple-of-128 kernel_size: exact-K output block, masked tail only.
    K2 = 200
    params3d_b = jax.random.uniform(jax.random.PRNGKey(1), (H, C, P),
                                    dtype=jnp.float32)
    mod2 = GeneralCosineWindow(kernel_size=K2, window_params=params3d_b,
                               force_pallas=True)
    win2 = jax.block_until_ready(mod2.forward(None))
    assert win2.shape == (H, C, K2), win2.shape
    assert jnp.allclose(win2, _reference(mod2, params3d_b), atol=1e-5, rtol=1e-5)

    # 3) Unaligned row count B=9 (full-B block path, no pad, no slice).
    params3d_c = jax.random.uniform(jax.random.PRNGKey(2), (3, 3, 2),
                                    dtype=jnp.float32)
    mod3 = GeneralCosineWindow(kernel_size=256, window_params=params3d_c,
                               force_pallas=True)
    win3 = jax.block_until_ready(mod3.forward(None))
    assert win3.shape == (3, 3, 256), win3.shape
    assert jnp.allclose(win3, _reference(mod3, params3d_c), atol=1e-5, rtol=1e-5)

    # 4) Large kernel_size exercises the K-tiled 2-D grid (with masked remainder).
    K4 = 2200
    params3d_d = jax.random.uniform(jax.random.PRNGKey(3), (2, 4, 2),
                                    dtype=jnp.float32)
    mod4 = GeneralCosineWindow(kernel_size=K4, window_params=params3d_d,
                               force_pallas=True)
    win4 = jax.block_until_ready(mod4.forward(None))
    assert win4.shape == (2, 4, K4), win4.shape
    assert jnp.allclose(win4, _reference(mod4, params3d_d), atol=1e-5, rtol=1e-5)

    # 5) Default shared Hann window ([0.5, 0.5]): tiny -> XLA fast path, shape (K,).
    mod_hann = GeneralCosineWindow(kernel_size=K, window_params=[0.5, 0.5])
    win_hann = jax.block_until_ready(mod_hann.forward(None))
    assert win_hann.shape == (K,), win_hann.shape
    ref_hann = 0.5 - 0.5 * jnp.cos(mod_hann.A_init[1])
    assert jnp.allclose(win_hann, ref_hann, atol=1e-5, rtol=1e-5)
    # Same values through the Pallas path (B=1, full-row block).
    mod_hann_p = GeneralCosineWindow(kernel_size=K, window_params=[0.5, 0.5],
                                     force_pallas=True)
    win_hann_p = jax.block_until_ready(mod_hann_p.forward(None))
    assert jnp.allclose(win_hann_p, ref_hann, atol=1e-5, rtol=1e-5)

    print("KERNEL_OK")
</pallas_src>

<mosaic_0001>
module attributes {stable_mosaic.version = 11 : i64} {
  func.func @_general_cosine_window_kernel(%arg0: i32, %arg1: i32, %arg2: memref<8x3xf32, #tpu.memory_space<vmem>>, %arg3: memref<3x128xf32, #tpu.memory_space<vmem>>, %arg4: memref<8x128xf32, #tpu.memory_space<vmem>>) attributes {dimension_semantics = [#tpu.dimension_semantics<parallel>, #tpu.dimension_semantics<parallel>], iteration_bounds = array<i64: 1, 1>, scalar_prefetch = 0 : i64, scratch_operands = 0 : i64, tpu.core_type = #tpu.core_type<tc>, window_params = [{transform_indices = @transform_0, window_bounds = array<i64: 8, 3>}, {transform_indices = @transform_1, window_bounds = array<i64: 3, 128>}, {transform_indices = @transform_2, window_bounds = array<i64: 8, 128>}]} {
    %c0 = arith.constant 0 : index
    %c0_0 = arith.constant 0 : index
    %0 = vector.load %arg2[%c0, %c0_0] : memref<8x3xf32, #tpu.memory_space<vmem>>, vector<8x3xf32>
    %c0_1 = arith.constant 0 : index
    %c0_2 = arith.constant 0 : index
    %1 = vector.load %arg3[%c0_1, %c0_2] : memref<3x128xf32, #tpu.memory_space<vmem>>, vector<3x128xf32>
    %2 = vector.extract_strided_slice %0 {offsets = [0, 0], sizes = [8, 1], strides = [1, 1]} : vector<8x3xf32> to vector<8x1xf32>
    %3 = vector.extract_strided_slice %1 {offsets = [0, 0], sizes = [1, 128], strides = [1, 1]} : vector<3x128xf32> to vector<1x128xf32>
    %4 = vector.broadcast %2 : vector<8x1xf32> to vector<8x128xf32>
    %5 = vector.broadcast %3 : vector<1x128xf32> to vector<8x128xf32>
    %6 = arith.mulf %4, %5 : vector<8x128xf32>
    %7 = vector.extract_strided_slice %0 {offsets = [0, 1], sizes = [8, 1], strides = [1, 1]} : vector<8x3xf32> to vector<8x1xf32>
    %8 = vector.extract_strided_slice %1 {offsets = [1, 0], sizes = [1, 128], strides = [1, 1]} : vector<3x128xf32> to vector<1x128xf32>
    %9 = vector.broadcast %7 : vector<8x1xf32> to vector<8x128xf32>
    %10 = vector.broadcast %8 : vector<1x128xf32> to vector<8x128xf32>
    %11 = arith.mulf %9, %10 : vector<8x128xf32>
    %12 = arith.addf %6, %11 : vector<8x128xf32>
    %13 = vector.extract_strided_slice %0 {offsets = [0, 2], sizes = [8, 1], strides = [1, 1]} : vector<8x3xf32> to vector<8x1xf32>
    %14 = vector.extract_strided_slice %1 {offsets = [2, 0], sizes = [1, 128], strides = [1, 1]} : vector<3x128xf32> to vector<1x128xf32>
    %15 = vector.broadcast %13 : vector<8x1xf32> to vector<8x128xf32>
    %16 = vector.broadcast %14 : vector<1x128xf32> to vector<8x128xf32>
    %17 = arith.mulf %15, %16 : vector<8x128xf32>
    %18 = arith.addf %12, %17 : vector<8x128xf32>
    %c0_3 = arith.constant 0 : index
    %c0_4 = arith.constant 0 : index
    %19 = vector.load %arg4[%c0_3, %c0_4] : memref<8x128xf32, #tpu.memory_space<vmem>>, vector<8x128xf32>
    tpu.vector_store %arg4[%c0_3, %c0_4], %18 {strides = array<i32>} : memref<8x128xf32, #tpu.memory_space<vmem>>, vector<8x128xf32>,
    return
  }
  func.func @transform_0(%arg0: i32, %arg1: i32) -> (i32, i32) {
    %c0_i32 = arith.constant 0 : i32
    %c0_i32_0 = arith.constant 0 : i32
    return %arg0, %c0_i32 : i32, i32
  }
  func.func @transform_1(%arg0: i32, %arg1: i32) -> (i32, i32) {
    %c0_i32 = arith.constant 0 : i32
    %c0_i32_0 = arith.constant 0 : i32
    return %c0_i32, %arg1 : i32, i32
  }
  func.func @transform_2(%arg0: i32, %arg1: i32) -> (i32, i32) {
    %c0_i32 = arith.constant 0 : i32
    return %arg0, %arg1 : i32, i32
  }
}

</mosaic_0001>

<llo_original>
// kernel: tpu_custom_call.1
$region0: #{tpu_custom_call.1}
  #allocation0 [shape = 'u32[]', space=smem, size = 0x4, offset = 0x4, fixed_abs, tag = 'smem constant byte address 0x4 - core index']
  #allocation1 [shape = 'u32[144,128]{1,0:T(1,128)}', space=vmem, size = 0x12000, scoped, tag = 'internal scratch']
  %s0 = inlined_call_operand.vmem [shape: f32[8,3], index: 0, kind: input, shape index: {}]
  %s1 = inlined_call_operand.vmem [shape: f32[3,128], index: 1, kind: input, shape index: {}]
  %s2 = inlined_call_operand.hbm [shape: f32[8,128], index: 2, kind: output, shape index: {}]
  %s3 = sld [smem:[#allocation0]]
  $region18: #{tpu_custom_call.1} parent=0
    _
  %s5 = ssub.s32 1, %s3
  %s6 = scalar_select 0, %s5, %s3
  $region1: #{tpu_custom_call.1} parent=0
    #allocation2 [shape = 'u8[4096]{0}', space=vmem, size = 0x1000, scoped, tag = 'output window, operand 0, single buffered']
    #allocation3 [shape = 's32[1]{0}', space=sflag, size = 0x4, scoped, tag = 'scoped memory for tpu_custom_call.1']
    %7 = vsyncpa [#allocation3], 0
    // Predicated region
    $region2: #{tpu_custom_call.1} parent=1 // pred_check
      _
    $region3: #{tpu_custom_call.1} parent=1 // pred_check_branch
      %9 = sbr.rel (0) target = $region5
    $region4: #{tpu_custom_call.1} parent=1 // pred_region
      _
    $region5: #{tpu_custom_call.1} parent=1 // pred_fallthru
      _
    // Predicated region
    $region6: #{tpu_custom_call.1} parent=1 // pred_check
      _
    $region7: #{tpu_custom_call.1} parent=1 // pred_check_branch
      %11 = sbr.rel (0) target = $region9
    $region8: #{tpu_custom_call.1} parent=1 // pred_region
      _
    $region9: #{tpu_custom_call.1} parent=1 // pred_fallthru
      _
    %v12 = vld [vmem:[%s0] sm:$0xff]
    %v13 = vld [vmem:[%s1] sm:$0x7]
    %15 = vset.pattern.permute.xlu0 0
    %16 = vperm.xlu0 %15, %v12
    %v17 = vpop.permute.xlu0 %16
    %v19 = vlaneseq
    %v20 = vshrl.u32 %v19, 7
    %v21 = vsub.s32 0, %v20
    %v22 = vrot.slane %v13, %v21
    %v23 = vmul.f32 %v17, %v22
    %24 = vset.pattern.permute.xlu0 1
    %25 = vperm.xlu0 %24, %v12
    %v26 = vpop.permute.xlu0 %25
    %v28 = vlaneseq
    %v29 = vshrl.u32 %v28, 7
    %v30 = vsub.s32 1, %v29
    %v31 = vrot.slane %v13, %v30
    %v32 = vmul.f32 %v26, %v31
    %v33 = vadd.f32 %v23, %v32
    %34 = vset.pattern.permute.xlu0 2
    %35 = vperm.xlu0 %34, %v12
    %v36 = vpop.permute.xlu0 %35
    %v38 = vlaneseq
    %v39 = vshrl.u32 %v38, 7
    %v40 = vsub.s32 2, %v39
    %v41 = vrot.slane %v13, %v40
    %v42 = vmul.f32 %v36, %v41
    %v43 = vadd.f32 %v33, %v42
    %44 = vst [vmem:[#allocation2] sm:$0xff] %v43
    // Predicated region
    $region10: #{tpu_custom_call.1} parent=1 // pred_check
      _
    $region11: #{tpu_custom_call.1} parent=1 // pred_check_branch
      %46 = sbr.rel (0) target = $region13
    $region12: #{tpu_custom_call.1} parent=1 // pred_region
      %s48 = ssub.s32 128, 128
      %49 = vsyncadd [#allocation3], %s48
      %s51 = sshll.u32 [#allocation2], 4
      %s52 = int_to_ptr.vmem [resolvable:$true] %s51
      %54 = dma.vmem_to_hbm [thread:$0]  %s52, 128, %s2, [#allocation3]
    $region13: #{tpu_custom_call.1} parent=1 // pred_fallthru
      _
    // Predicated region
    $region14: #{tpu_custom_call.1} parent=1 // pred_check
      _
    $region15: #{tpu_custom_call.1} parent=1 // pred_check_branch
      %56 = sbr.rel (0) target = $region17
    $region16: #{tpu_custom_call.1} parent=1 // pred_region
      %57 = dma.done [#allocation3], 128
    $region17: #{tpu_custom_call.1} parent=1 // pred_fallthru
      _
    %58 = vsyncpa [#allocation3], 1

</llo_original>
